<compile_context>
chip_gen: v5e
topology: v5e:2x2
jax: 0.10.0
libtpu: 0.0.40
codegen_flags: <defaults>
</compile_context>

<pallas_src>
import functools

import jax
import jax.numpy as jnp
from jax import lax
from jax.experimental import pallas as pl
from jax.experimental.pallas import tpu as pltpu


# ----------------------------------------------------------------------------
# helpers
# ----------------------------------------------------------------------------
def _round_up(x, m):
    return (x + m - 1) // m * m


def _pick_tile(dim, candidates):
    """Largest candidate that divides dim; falls back to the full dim."""
    for c in candidates:
        if c <= dim and dim % c == 0:
            return c
    return dim


# ----------------------------------------------------------------------------
# Tiled matmul kernel: (M, K) @ (K, N) -> (M, N), f32 accumulation in VMEM.
# Used for both the hoisted input projections (x @ W_ih) and the lm_head.
# ----------------------------------------------------------------------------
def _matmul_kernel(x_ref, w_ref, o_ref, acc_ref):
    @pl.when(pl.program_id(2) == 0)
    def _():
        acc_ref[...] = jnp.zeros_like(acc_ref)

    acc_ref[...] += jnp.dot(x_ref[...], w_ref[...],
                            preferred_element_type=jnp.float32)

    @pl.when(pl.program_id(2) == pl.num_programs(2) - 1)
    def _():
        o_ref[...] = acc_ref[...].astype(o_ref.dtype)


def tiled_matmul(x, w):
    M, K = x.shape
    K2, N = w.shape
    assert K == K2
    # M is padded to a multiple of 8, K/N to multiples of 128 by the callers.
    tm = _pick_tile(M, (256, 128, 64, 32, 16, 8))
    tn = _pick_tile(N, (512, 256, 128))
    tk = _pick_tile(K, (512, 256, 128))
    grid = (M // tm, N // tn, K // tk)
    return pl.pallas_call(
        _matmul_kernel,
        out_shape=jax.ShapeDtypeStruct((M, N), jnp.float32),
        grid_spec=pltpu.PrefetchScalarGridSpec(
            num_scalar_prefetch=0,
            grid=grid,
            in_specs=[
                pl.BlockSpec((tm, tk), lambda i, j, k: (i, k)),
                pl.BlockSpec((tk, tn), lambda i, j, k: (k, j)),
            ],
            out_specs=pl.BlockSpec((tm, tn), lambda i, j, k: (i, j)),
            scratch_shapes=[pltpu.VMEM((tm, tn), jnp.float32)],
        ),
        compiler_params=pltpu.CompilerParams(
            dimension_semantics=("parallel", "parallel", "arbitrary")),
    )(x, w)


# ----------------------------------------------------------------------------
# LSTM recurrence kernel.
#   gx     : (Tp, Bp, 4*Hp)  precomputed x @ W_ih  (gate order [i, f, o, g])
#   w_hh_t : (Hp, 4*Hp)
#   b      : (1, 4*Hp)       b_ih + b_hh (reordered / padded)
# Grid iterates over time blocks of Tc steps; (h, c) carries live in VMEM
# scratch across the whole grid.
# ----------------------------------------------------------------------------
def _lstm_recurrent_kernel(gx_ref, w_hh_ref, b_ref, h_out_ref,
                           h_scr, c_scr, *, hidden, t_chunk):
    @pl.when(pl.program_id(0) == 0)
    def _():
        h_scr[...] = jnp.zeros_like(h_scr)
        c_scr[...] = jnp.zeros_like(c_scr)

    w_hh = w_hh_ref[...]          # (Hp, 4Hp), resident across the block
    b = b_ref[...]                # (1, 4Hp)

    def step(t, carry):
        h_prev = h_scr[...]
        gates = (gx_ref[t]
                 + jnp.dot(h_prev, w_hh, preferred_element_type=jnp.float32)
                 + b)                                   # (Bp, 4Hp)
        # gate order [i, f, o, g]: one sigmoid over a contiguous 3H slab.
        ifo = jax.nn.sigmoid(gates[:, :3 * hidden])
        g = jnp.tanh(gates[:, 3 * hidden:])
        i = ifo[:, 0 * hidden:1 * hidden]
        f = ifo[:, 1 * hidden:2 * hidden]
        o = ifo[:, 2 * hidden:3 * hidden]
        c_new = f * c_scr[...] + i * g
        h_new = o * jnp.tanh(c_new)
        c_scr[...] = c_new
        h_scr[...] = h_new
        h_out_ref[t] = h_new
        return carry

    lax.fori_loop(0, t_chunk, step, 0, unroll=True)


def lstm_recurrence(gx, w_hh_t, b, *, t_chunk):
    Tp, Bp, H4 = gx.shape
    Hp = w_hh_t.shape[0]
    kernel = functools.partial(_lstm_recurrent_kernel,
                               hidden=Hp, t_chunk=t_chunk)
    return pl.pallas_call(
        kernel,
        out_shape=jax.ShapeDtypeStruct((Tp, Bp, Hp), jnp.float32),
        grid_spec=pltpu.PrefetchScalarGridSpec(
            num_scalar_prefetch=0,
            grid=(Tp // t_chunk,),
            in_specs=[
                pl.BlockSpec((t_chunk, Bp, H4), lambda t: (t, 0, 0)),
                pl.BlockSpec((Hp, H4), lambda t: (0, 0)),
                pl.BlockSpec((1, H4), lambda t: (0, 0)),
            ],
            out_specs=pl.BlockSpec((t_chunk, Bp, Hp), lambda t: (t, 0, 0)),
            scratch_shapes=[pltpu.VMEM((Bp, Hp), jnp.float32),
                            pltpu.VMEM((Bp, Hp), jnp.float32)],
        ),
        compiler_params=pltpu.CompilerParams(
            dimension_semantics=("arbitrary",)),   # sequential recurrence
    )(gx, w_hh_t, b)


# ----------------------------------------------------------------------------
# Parameter construction (raw PyTorch-layout params) + kernel-layout prep
# ----------------------------------------------------------------------------
def init_params(key, vocab_size, dim_wordE, dim_LSTMh, num_layers=3):
    """Raw params with the exact shapes of the PyTorch module."""
    keys = jax.random.split(key, 2 + num_layers * 4)
    k = 1.0 / jnp.sqrt(jnp.float32(dim_LSTMh))

    embed = jax.random.normal(keys[0], (vocab_size, dim_wordE), jnp.float32)
    # lm_head weight is supplied externally in the PyTorch module; here it's
    # just a deterministic tensor of the right shape (vocab_size, dim_LSTMh).
    lm_head = jax.random.normal(keys[1], (vocab_size, dim_LSTMh),
                                jnp.float32) * 0.02

    layers = []
    for l in range(num_layers):
        e_in = dim_wordE if l == 0 else dim_LSTMh
        kk = keys[2 + 4 * l: 2 + 4 * (l + 1)]
        layers.append({
            "w_ih": jax.random.uniform(kk[0], (4 * dim_LSTMh, e_in),
                                       jnp.float32, -k, k),
            "w_hh": jax.random.uniform(kk[1], (4 * dim_LSTMh, dim_LSTMh),
                                       jnp.float32, -k, k),
            "b_ih": jax.random.uniform(kk[2], (4 * dim_LSTMh,),
                                       jnp.float32, -k, k),
            "b_hh": jax.random.uniform(kk[3], (4 * dim_LSTMh,),
                                       jnp.float32, -k, k),
        })
    return {"embed": embed, "lm_head": lm_head, "lstm": layers}


def prepare_params(raw, *, lane=128):
    """Pad to (8,128)-friendly shapes, transpose weights, and reorder gates
    from PyTorch [i, f, g, o] to kernel order [i, f, o, g]."""
    embed = raw["embed"]
    lm_head = raw["lm_head"]
    V, E = embed.shape
    H = lm_head.shape[1]
    Ep = _round_up(E, lane)
    Hp = _round_up(H, lane)
    Vp = _round_up(V, lane)

    embed_p = jnp.pad(embed, ((0, 0), (0, Ep - E)))
    lm_head_t = jnp.pad(lm_head, ((0, Vp - V), (0, Hp - H))).T      # (Hp, Vp)

    layers = []
    for li, lyr in enumerate(raw["lstm"]):
        w_ih, w_hh = lyr["w_ih"], lyr["w_hh"]          # (4H, Ein), (4H, H)
        b = lyr["b_ih"] + lyr["b_hh"]                  # (4H,)
        ein_p = Ep if li == 0 else Hp

        def gate_blocks(a):
            i, f, g, o = (a[k * H:(k + 1) * H] for k in range(4))
            return (i, f, o, g)                        # -> [i, f, o, g]

        def pad_w(blk, cols_p):
            return jnp.pad(blk, ((0, Hp - H), (0, cols_p - blk.shape[1])))

        w_ih_t = jnp.concatenate(
            [pad_w(blk, ein_p) for blk in gate_blocks(w_ih)], axis=0).T
        w_hh_t = jnp.concatenate(
            [pad_w(blk, Hp) for blk in gate_blocks(w_hh)], axis=0).T
        b_p = jnp.concatenate(
            [jnp.pad(blk, (0, Hp - H)) for blk in gate_blocks(b)]).reshape(1, -1)

        layers.append({"w_ih_t": w_ih_t,               # (Ein_p, 4Hp)
                       "w_hh_t": w_hh_t,               # (Hp, 4Hp)
                       "b": b_p})                      # (1, 4Hp)

    return {"embed": embed_p, "lm_head_t": lm_head_t, "lstm": layers,
            "dims": {"E": E, "H": H, "V": V}}


# ----------------------------------------------------------------------------
# Forward pass (mirrors LSTM.forward)
# ----------------------------------------------------------------------------
def lstm_model_forward(params, x_ids, labels=None, *, t_chunk=16):
    H = params["dims"]["H"]
    V = params["dims"]["V"]

    # Embedding lookup (gather) kept as plain-JAX glue.
    emb = params["embed"][x_ids]                       # (B, T, Ep)
    B, T, _ = emb.shape
    Bp = _round_up(B, 8)
    Tc = min(t_chunk, T)
    Tp = _round_up(T, Tc)

    x = jnp.transpose(emb, (1, 0, 2))                  # time-major (T, B, Ep)
    x = jnp.pad(x, ((0, Tp - T), (0, Bp - B), (0, 0)))

    h = x
    for layer in params["lstm"]:
        ein = h.shape[-1]
        h4 = layer["w_ih_t"].shape[1]
        # Hoisted input projection: one big tiled MXU matmul for all timesteps.
        gx = tiled_matmul(h.reshape(Tp * Bp, ein),
                          layer["w_ih_t"]).reshape(Tp, Bp, h4)
        # Serial recurrence: only h_prev @ W_hh + gx + b per step.
        h = lstm_recurrence(gx, layer["w_hh_t"], layer["b"], t_chunk=Tc)

    Hp = h.shape[-1]
    hidden_p = jnp.transpose(h, (1, 0, 2))             # (Bp, Tp, Hp)
    logits_p = tiled_matmul(hidden_p.reshape(Bp * Tp, Hp),
                            params["lm_head_t"]).reshape(Bp, Tp, -1)

    hidden_units = hidden_p[:B, :T, :H]
    lm_logits = logits_p[:B, :T, :V]

    outputs = (lm_logits, hidden_units)
    if labels is not None:
        # Shifted CE loss (mean over tokens), plain-JAX glue on kernel outputs.
        shift_logits = lm_logits[:, :-1, :].reshape(-1, V)
        shift_labels = labels[:, 1:].reshape(-1)
        logp = jax.nn.log_softmax(shift_logits, axis=-1)
        loss = -jnp.mean(jnp.take_along_axis(logp, shift_labels[:, None],
                                             axis=-1))
        outputs = (loss,) + outputs
    return outputs


# ----------------------------------------------------------------------------
# Pure-JAX reference (lax.scan LSTM, PyTorch gate order) for correctness check
# ----------------------------------------------------------------------------
def _reference_forward(raw, x_ids):
    emb = raw["embed"][x_ids]                          # (B, T, E)
    x = jnp.transpose(emb, (1, 0, 2))                  # (T, B, E)
    for lyr in raw["lstm"]:
        w_ih_t = lyr["w_ih"].T
        w_hh_t = lyr["w_hh"].T
        b = (lyr["b_ih"] + lyr["b_hh"])[None, :]
        H = lyr["w_hh"].shape[1]
        B = x.shape[1]

        def step(carry, x_t, w_ih_t=w_ih_t, w_hh_t=w_hh_t, b=b, H=H):
            h_prev, c_prev = carry
            gates = x_t @ w_ih_t + h_prev @ w_hh_t + b
            i = jax.nn.sigmoid(gates[:, 0 * H:1 * H])
            f = jax.nn.sigmoid(gates[:, 1 * H:2 * H])
            g = jnp.tanh(gates[:, 2 * H:3 * H])
            o = jax.nn.sigmoid(gates[:, 3 * H:4 * H])
            c = f * c_prev + i * g
            h = o * jnp.tanh(c)
            return (h, c), h

        init = (jnp.zeros((B, H), jnp.float32), jnp.zeros((B, H), jnp.float32))
        _, x = lax.scan(step, init, x)
    hidden = jnp.transpose(x, (1, 0, 2))
    logits = hidden @ raw["lm_head"].T
    return logits, hidden


if __name__ == "__main__":
    vocab_size, dim_wordE, dim_LSTMh = 256, 16, 32
    batch, seq = 2, 8

    key = jax.random.PRNGKey(0)
    pkey, xkey = jax.random.split(key)
    raw_params = init_params(pkey, vocab_size, dim_wordE, dim_LSTMh)
    params = prepare_params(raw_params)

    x = jax.random.randint(xkey, (batch, seq), 0, vocab_size, dtype=jnp.int32)
    labels = x  # LM-style: labels are the input ids (shifted inside forward)

    loss, lm_logits, hidden_units = jax.block_until_ready(
        lstm_model_forward(params, x, labels=labels))

    # correctness check vs pure-JAX reference (raw PyTorch-layout params)
    ref_logits, ref_hidden = _reference_forward(raw_params, x)
    assert lm_logits.shape == (batch, seq, vocab_size)
    assert hidden_units.shape == (batch, seq, dim_LSTMh)
    assert jnp.allclose(hidden_units, ref_hidden, atol=1e-4, rtol=1e-4)
    assert jnp.allclose(lm_logits, ref_logits, atol=1e-3, rtol=1e-3)
    assert jnp.isfinite(loss)

    print("KERNEL_OK")
</pallas_src>

<mosaic_0001>
module attributes {stable_mosaic.version = 11 : i64} {
  func.func @_matmul_kernel(%arg0: i32, %arg1: i32, %arg2: i32, %arg3: memref<64x128xf32, #tpu.memory_space<vmem>>, %arg4: memref<128x512xf32, #tpu.memory_space<vmem>>, %arg5: memref<64x512xf32, #tpu.memory_space<vmem>>, %arg6: memref<64x512xf32, #tpu.memory_space<vmem>>) attributes {dimension_semantics = [#tpu.dimension_semantics<parallel>, #tpu.dimension_semantics<parallel>, #tpu.dimension_semantics<arbitrary>], iteration_bounds = array<i64: 1, 1, 1>, scalar_prefetch = 0 : i64, scratch_operands = 1 : i64, tpu.core_type = #tpu.core_type<tc>, window_params = [{transform_indices = @transform_0, window_bounds = array<i64: 64, 128>}, {transform_indices = @transform_1, window_bounds = array<i64: 128, 512>}, {transform_indices = @transform_2, window_bounds = array<i64: 64, 512>}]} {
    %c0_i32 = arith.constant 0 : i32
    %0 = arith.cmpi eq, %arg2, %c0_i32 : i32
    %1 = arith.extui %0 : i1 to i32
    %c0_i32_0 = arith.constant 0 : i32
    %2 = arith.cmpi ne, %1, %c0_i32_0 : i32
    scf.if %2 {
      %cst_10 = arith.constant 0.000000e+00 : f32
      %12 = vector.broadcast %cst_10 : f32 to vector<64x512xf32>
      %c0_11 = arith.constant 0 : index
      %c0_12 = arith.constant 0 : index
      %13 = vector.load %arg6[%c0_11, %c0_12] : memref<64x512xf32, #tpu.memory_space<vmem>>, vector<64x512xf32>
      tpu.vector_store %arg6[%c0_11, %c0_12], %12 {strides = array<i32>} : memref<64x512xf32, #tpu.memory_space<vmem>>, vector<64x512xf32>,
    } else {
    }
    %c0 = arith.constant 0 : index
    %c0_1 = arith.constant 0 : index
    %3 = vector.load %arg6[%c0, %c0_1] : memref<64x512xf32, #tpu.memory_space<vmem>>, vector<64x512xf32>
    %c0_2 = arith.constant 0 : index
    %c0_3 = arith.constant 0 : index
    %4 = vector.load %arg3[%c0_2, %c0_3] : memref<64x128xf32, #tpu.memory_space<vmem>>, vector<64x128xf32>
    %c0_4 = arith.constant 0 : index
    %c0_5 = arith.constant 0 : index
    %5 = vector.load %arg4[%c0_4, %c0_5] : memref<128x512xf32, #tpu.memory_space<vmem>>, vector<128x512xf32>
    %cst = arith.constant dense<0.000000e+00> : vector<64x512xf32>
    %6 = tpu.matmul %4, %5, %cst {dimension_numbers = #tpu.dot_dimension_numbers<[1], [0], [0], [1], [0, 0, 1, 1], [], []>} : vector<64x128xf32>, vector<128x512xf32>, vector<64x512xf32> -> vector<64x512xf32>
    %7 = arith.addf %3, %6 : vector<64x512xf32>
    %c0_6 = arith.constant 0 : index
    %c0_7 = arith.constant 0 : index
    %8 = vector.load %arg6[%c0_6, %c0_7] : memref<64x512xf32, #tpu.memory_space<vmem>>, vector<64x512xf32>
    tpu.vector_store %arg6[%c0_6, %c0_7], %7 {strides = array<i32>} : memref<64x512xf32, #tpu.memory_space<vmem>>, vector<64x512xf32>,
    %c0_i32_8 = arith.constant 0 : i32
    %9 = arith.cmpi eq, %arg2, %c0_i32_8 : i32
    %10 = arith.extui %9 : i1 to i32
    %c0_i32_9 = arith.constant 0 : i32
    %11 = arith.cmpi ne, %10, %c0_i32_9 : i32
    scf.if %11 {
      %c0_10 = arith.constant 0 : index
      %c0_11 = arith.constant 0 : index
      %12 = vector.load %arg6[%c0_10, %c0_11] : memref<64x512xf32, #tpu.memory_space<vmem>>, vector<64x512xf32>
      %c0_12 = arith.constant 0 : index
      %c0_13 = arith.constant 0 : index
      %13 = vector.load %arg5[%c0_12, %c0_13] : memref<64x512xf32, #tpu.memory_space<vmem>>, vector<64x512xf32>
      tpu.vector_store %arg5[%c0_12, %c0_13], %12 {strides = array<i32>} : memref<64x512xf32, #tpu.memory_space<vmem>>, vector<64x512xf32>,
    } else {
    }
    return
  }
  func.func @transform_0(%arg0: i32, %arg1: i32, %arg2: i32) -> (i32, i32) {
    %c0_i32 = arith.constant 0 : i32
    return %arg0, %arg2 : i32, i32
  }
  func.func @transform_1(%arg0: i32, %arg1: i32, %arg2: i32) -> (i32, i32) {
    %c0_i32 = arith.constant 0 : i32
    return %arg2, %arg1 : i32, i32
  }
  func.func @transform_2(%arg0: i32, %arg1: i32, %arg2: i32) -> (i32, i32) {
    %c0_i32 = arith.constant 0 : i32
    return %arg0, %arg1 : i32, i32
  }
}

</mosaic_0001>

<llo_original>
// kernel: tpu_custom_call.1
$region0: #{tpu_custom_call.1}
  #allocation0 [shape = 'u32[]', space=smem, size = 0x4, offset = 0x4, fixed_abs, tag = 'smem constant byte address 0x4 - core index']
  #allocation1 [shape = 'u32[72,128]{1,0:T(1,128)}', space=vmem, size = 0x9000, scoped, tag = 'internal scratch']
  #allocation2 [shape = 'f32[64,512]{1,0:T(8,128)}', space=vmem, size = 0x20000, scoped, tag = 'scratch operand']
  %s0 = inlined_call_operand.hbm [shape: f32[64,128], index: 0, kind: input, shape index: {}]
  %s1 = inlined_call_operand.hbm [shape: f32[128,512], index: 1, kind: input, shape index: {}]
  %s2 = inlined_call_operand.hbm [shape: f32[64,512], index: 2, kind: output, shape index: {}]
  %s3 = sld [smem:[#allocation0]]
  $region34: #{tpu_custom_call.1} parent=0
    _
  %s5 = ssub.s32 1, %s3
  %s6 = scalar_select 0, %s5, %s3
  $region1: #{tpu_custom_call.1} parent=0
    #allocation3 [shape = 'u8[32768]{0}', space=vmem, size = 0x8000, scoped, tag = 'input window, operand 0, single buffered']
    #allocation4 [shape = 's32[1]{0}', space=sflag, size = 0x4, scoped, tag = 'scoped memory for tpu_custom_call.1']
    #allocation5 [shape = 's32[1]{0}', space=sflag, size = 0x4, scoped, tag = 'scoped memory for tpu_custom_call.1']
    #allocation6 [shape = 'u8[262144]{0}', space=vmem, size = 0x40000, scoped, tag = 'input window, operand 1, single buffered']
    #allocation7 [shape = 's32[1]{0}', space=sflag, size = 0x4, scoped, tag = 'scoped memory for tpu_custom_call.1']
    #allocation8 [shape = 'u8[131072]{0}', space=vmem, size = 0x20000, scoped, tag = 'output window, operand 0, single buffered']
    %7 = vsyncpa [#allocation4], 0
    %8 = vsyncpa [#allocation7], 0
    %9 = vsyncpa [#allocation5], 0
    // Predicated region
    $region2: #{tpu_custom_call.1} parent=1 // pred_check
      _
    $region3: #{tpu_custom_call.1} parent=1 // pred_check_branch
      %11 = sbr.rel (0) target = $region5
    $region4: #{tpu_custom_call.1} parent=1 // pred_region
      %13 = vsyncadd [#allocation4], 0
      %s14 = sshll.u32 %s0, 4
      %s15 = int_to_ptr.hbm [resolvable:$true] %s14
      %s16 = sshll.u32 [#allocation3], 4
      %s17 = int_to_ptr.vmem [resolvable:$true] %s16
      %22 = dma.hbm_to_vmem [thread:$0]  %s15, 1024, %s17, [#allocation4], 128, 128, 8
    $region5: #{tpu_custom_call.1} parent=1 // pred_fallthru
      _
    // Predicated region
    $region6: #{tpu_custom_call.1} parent=1 // pred_check
      _
    $region7: #{tpu_custom_call.1} parent=1 // pred_check_branch
      %24 = sbr.rel (0) target = $region9
    $region8: #{tpu_custom_call.1} parent=1 // pred_region
      %26 = vsyncadd [#allocation7], 0
      %s27 = sshll.u32 %s1, 4
      %s28 = int_to_ptr.hbm [resolvable:$true] %s27
      %s29 = sshll.u32 [#allocation6], 4
      %s30 = int_to_ptr.vmem [resolvable:$true] %s29
      %35 = dma.hbm_to_vmem [thread:$0]  %s28, 8192, %s30, [#allocation7], 512, 512, 32
    $region9: #{tpu_custom_call.1} parent=1 // pred_fallthru
      _
    // Predicated region
    $region10: #{tpu_custom_call.1} parent=1 // pred_check
      _
    $region11: #{tpu_custom_call.1} parent=1 // pred_check_branch
      %37 = sbr.rel (0) target = $region13
    $region12: #{tpu_custom_call.1} parent=1 // pred_region
      %39 = dma.done [#allocation4], 1024
    $region13: #{tpu_custom_call.1} parent=1 // pred_fallthru
      _
    // Predicated region
    $region14: #{tpu_custom_call.1} parent=1 // pred_check
      _
    $region15: #{tpu_custom_call.1} parent=1 // pred_check_branch
      %41 = sbr.rel (0) target = $region17
    $region16: #{tpu_custom_call.1} parent=1 // pred_region
      %43 = dma.done [#allocation7], 8192
    $region17: #{tpu_custom_call.1} parent=1 // pred_fallthru
      _
    %p44 = scmp.eq.s32.totalorder 0, 0
    // Predicated region
    $region18: #{tpu_custom_call.1} parent=1 // pred_check
      %p45 = pneg %p44
    $region19: #{tpu_custom_call.1} parent=1 // pred_check_branch
      %47 = sbr.rel (%p45) target = $region21
    $region20: #{tpu_custom_call.1} parent=1 // pred_region
      %48 = vst [vmem:[#allocation2] sm:$0xff] 0.0
      %49 = vst [vmem:[#allocation2 + $0x8] sm:$0xff] 0.0
      %50 = vst [vmem:[#allocation2 + $0x10] sm:$0xff] 0.0
      %51 = vst [vmem:[#allocation2 + $0x18] sm:$0xff] 0.0
      %52 = vst [vmem:[#allocation2 + $0x20] sm:$0xff] 0.0
      %53 = vst [vmem:[#allocation2 + $0x28] sm:$0xff] 0.0
      %54 = vst [vmem:[#allocation2 + $0x30] sm:$0xff] 0.0
      %55 = vst [vmem:[#allocation2 + $0x38] sm:$0xff] 0.0
      %56 = vst [vmem:[#allocation2 + $0x40] sm:$0xff] 0.0
      %57 = vst [vmem:[#allocation2 + $0x48] sm:$0xff] 0.0
      %58 = vst [vmem:[#allocation2 + $0x50] sm:$0xff] 0.0
      %59 = vst [vmem:[#allocation2 + $0x58] sm:$0xff] 0.0
      %60 = vst [vmem:[#allocation2 + $0x60] sm:$0xff] 0.0
      %61 = vst [vmem:[#allocation2 + $0x68] sm:$0xff] 0.0
      %62 = vst [vmem:[#allocation2 + $0x70] sm:$0xff] 0.0
      %63 = vst [vmem:[#allocation2 + $0x78] sm:$0xff] 0.0
      %64 = vst [vmem:[#allocation2 + $0x80] sm:$0xff] 0.0
      %65 = vst [vmem:[#allocation2 + $0x88] sm:$0xff] 0.0
      %66 = vst [vmem:[#allocation2 + $0x90] sm:$0xff] 0.0
      %67 = vst [vmem:[#allocation2 + $0x98] sm:$0xff] 0.0
      %68 = vst [vmem:[#allocation2 + $0xa0] sm:$0xff] 0.0
      %69 = vst [vmem:[#allocation2 + $0xa8] sm:$0xff] 0.0
      %70 = vst [vmem:[#allocation2 + $0xb0] sm:$0xff] 0.0
      %71 = vst [vmem:[#allocation2 + $0xb8] sm:$0xff] 0.0
      %72 = vst [vmem:[#allocation2 + $0xc0] sm:$0xff] 0.0
      %73 = vst [vmem:[#allocation2 + $0xc8] sm:$0xff] 0.0
      %74 = vst [vmem:[#allocation2 + $0xd0] sm:$0xff] 0.0
      %75 = vst [vmem:[#allocation2 + $0xd8] sm:$0xff] 0.0
      %76 = vst [vmem:[#allocation2 + $0xe0] sm:$0xff] 0.0
      %77 = vst [vmem:[#allocation2 + $0xe8] sm:$0xff] 0.0
      %78 = vst [vmem:[#allocation2 + $0xf0] sm:$0xff] 0.0
      %79 = vst [vmem:[#allocation2 + $0xf8] sm:$0xff] 0.0
    $region21: #{tpu_custom_call.1} parent=1 // pred_fallthru
      _
    %v80 = vld [vmem:[#allocation2] sm:$0xff]
    %v81 = vld [vmem:[#allocation2 + $0x8] sm:$0xff]
    %v82 = vld [vmem:[#allocation2 + $0x10] sm:$0xff]
    %v83 = vld [vmem:[#allocation2 + $0x18] sm:$0xff]
    %v84 = vld [vmem:[#allocation2 + $0x20] sm:$0xff]
    %v85 = vld [vmem:[#allocation2 + $0x28] sm:$0xff]
    %v86 = vld [vmem:[#allocation2 + $0x30] sm:$0xff]
    %v87 = vld [vmem:[#allocation2 + $0x38] sm:$0xff]
    %v88 = vld [vmem:[#allocation2 + $0x40] sm:$0xff]
    %v89 = vld [vmem:[#allocation2 + $0x48] sm:$0xff]
    %v90 = vld [vmem:[#allocation2 + $0x50] sm:$0xff]
    %v91 = vld [vmem:[#allocation2 + $0x58] sm:$0xff]
    %v92 = vld [vmem:[#allocation2 + $0x60] sm:$0xff]
    %v93 = vld [vmem:[#allocation2 + $0x68] sm:$0xff]
    %v94 = vld [vmem:[#allocation2 + $0x70] sm:$0xff]
    %v95 = vld [vmem:[#allocation2 + $0x78] sm:$0xff]
    %v96 = vld [vmem:[#allocation2 + $0x80] sm:$0xff]
    %v97 = vld [vmem:[#allocation2 + $0x88] sm:$0xff]
    %v98 = vld [vmem:[#allocation2 + $0x90] sm:$0xff]
    %v99 = vld [vmem:[#allocation2 + $0x98] sm:$0xff]
    %v100 = vld [vmem:[#allocation2 + $0xa0] sm:$0xff]
    %v101 = vld [vmem:[#allocation2 + $0xa8] sm:$0xff]
    %v102 = vld [vmem:[#allocation2 + $0xb0] sm:$0xff]
    %v103 = vld [vmem:[#allocation2 + $0xb8] sm:$0xff]
    %v104 = vld [vmem:[#allocation2 + $0xc0] sm:$0xff]
    %v105 = vld [vmem:[#allocation2 + $0xc8] sm:$0xff]
    %v106 = vld [vmem:[#allocation2 + $0xd0] sm:$0xff]
    %v107 = vld [vmem:[#allocation2 + $0xd8] sm:$0xff]
    %v108 = vld [vmem:[#allocation2 + $0xe0] sm:$0xff]
    %v109 = vld [vmem:[#allocation2 + $0xe8] sm:$0xff]
    %v110 = vld [vmem:[#allocation2 + $0xf0] sm:$0xff]
    %v111 = vld [vmem:[#allocation2 + $0xf8] sm:$0xff]
    %v112 = vld [vmem:[#allocation3] sm:$0xff]
    %v113 = vld [vmem:[#allocation3 + $0x8] sm:$0xff]
    %v114 = vld [vmem:[#allocation3 + $0x10] sm:$0xff]
    %v115 = vld [vmem:[#allocation3 + $0x18] sm:$0xff]
    %v116 = vld [vmem:[#allocation3 + $0x20] sm:$0xff]
    %v117 = vld [vmem:[#allocation3 + $0x28] sm:$0xff]
    %v118 = vld [vmem:[#allocation3 + $0x30] sm:$0xff]
    %v119 = vld [vmem:[#allocation3 + $0x38] sm:$0xff]
    %v120 = vld [vmem:[#allocation6] sm:$0xff]
    %v121 = vld [vmem:[#allocation6 + $0x8] sm:$0xff]
    %v122 = vld [vmem:[#allocation6 + $0x10] sm:$0xff]
    %v123 = vld [vmem:[#allocation6 + $0x18] sm:$0xff]
    %v124 = vld [vmem:[#allocation6 + $0x20] sm:$0xff]
    %v125 = vld [vmem:[#allocation6 + $0x28] sm:$0xff]
    %v126 = vld [vmem:[#allocation6 + $0x30] sm:$0xff]
    %v127 = vld [vmem:[#allocation6 + $0x38] sm:$0xff]
    %v128 = vld [vmem:[#allocation6 + $0x40] sm:$0xff]
    %v129 = vld [vmem:[#allocation6 + $0x48] sm:$0xff]
    %v130 = vld [vmem:[#allocation6 + $0x50] sm:$0xff]
    %v131 = vld [vmem:[#allocation6 + $0x58] sm:$0xff]
    %v132 = vld [vmem:[#allocation6 + $0x60] sm:$0xff]
    %v133 = vld [vmem:[#allocation6 + $0x68] sm:$0xff]
    %v134 = vld [vmem:[#allocation6 + $0x70] sm:$0xff]
    %v135 = vld [vmem:[#allocation6 + $0x78] sm:$0xff]
    %v136 = vld [vmem:[#allocation6 + $0x80] sm:$0xff]
    %v137 = vld [vmem:[#allocation6 + $0x88] sm:$0xff]
    %v138 = vld [vmem:[#allocation6 + $0x90] sm:$0xff]
    %v139 = vld [vmem:[#allocation6 + $0x98] sm:$0xff]
    %v140 = vld [vmem:[#allocation6 + $0xa0] sm:$0xff]
    %v141 = vld [vmem:[#allocation6 + $0xa8] sm:$0xff]
    %v142 = vld [vmem:[#allocation6 + $0xb0] sm:$0xff]
    %v143 = vld [vmem:[#allocation6 + $0xb8] sm:$0xff]
    %v144 = vld [vmem:[#allocation6 + $0xc0] sm:$0xff]
    %v145 = vld [vmem:[#allocation6 + $0xc8] sm:$0xff]
    %v146 = vld [vmem:[#allocation6 + $0xd0] sm:$0xff]
    %v147 = vld [vmem:[#allocation6 + $0xd8] sm:$0xff]
    %v148 = vld [vmem:[#allocation6 + $0xe0] sm:$0xff]
    %v149 = vld [vmem:[#allocation6 + $0xe8] sm:$0xff]
    %v150 = vld [vmem:[#allocation6 + $0xf0] sm:$0xff]
    %v151 = vld [vmem:[#allocation6 + $0xf8] sm:$0xff]
    %v152 = vld [vmem:[#allocation6 + $0x100] sm:$0xff]
    %v153 = vld [vmem:[#allocation6 + $0x108] sm:$0xff]
    %v154 = vld [vmem:[#allocation6 + $0x110] sm:$0xff]
    %v155 = vld [vmem:[#allocation6 + $0x118] sm:$0xff]
    %v156 = vld [vmem:[#allocation6 + $0x120] sm:$0xff]
    %v157 = vld [vmem:[#allocation6 + $0x128] sm:$0xff]
    %v158 = vld [vmem:[#allocation6 + $0x130] sm:$0xff]
    %v159 = vld [vmem:[#allocation6 + $0x138] sm:$0xff]
    %v160 = vld [vmem:[#allocation6 + $0x140] sm:$0xff]
    %v161 = vld [vmem:[#allocation6 + $0x148] sm:$0xff]
    %v162 = vld [vmem:[#allocation6 + $0x150] sm:$0xff]
    %v163 = vld [vmem:[#allocation6 + $0x158] sm:$0xff]
    %v164 = vld [vmem:[#allocation6 + $0x160] sm:$0xff]
    %v165 = vld [vmem:[#allocation6 + $0x168] sm:$0xff]
    %v166 = vld [vmem:[#allocation6 + $0x170] sm:$0xff]
    %v167 = vld [vmem:[#allocation6 + $0x178] sm:$0xff]
    %v168 = vld [vmem:[#allocation6 + $0x180] sm:$0xff]
    %v169 = vld [vmem:[#allocation6 + $0x188] sm:$0xff]
    %v170 = vld [vmem:[#allocation6 + $0x190] sm:$0xff]
    %v171 = vld [vmem:[#allocation6 + $0x198] sm:$0xff]
    %v172 = vld [vmem:[#allocation6 + $0x1a0] sm:$0xff]
    %v173 = vld [vmem:[#allocation6 + $0x1a8] sm:$0xff]
    %v174 = vld [vmem:[#allocation6 + $0x1b0] sm:$0xff]
    %v175 = vld [vmem:[#allocation6 + $0x1b8] sm:$0xff]
    %v176 = vld [vmem:[#allocation6 + $0x1c0] sm:$0xff]
    %v177 = vld [vmem:[#allocation6 + $0x1c8] sm:$0xff]
    %v178 = vld [vmem:[#allocation6 + $0x1d0] sm:$0xff]
    %v179 = vld [vmem:[#allocation6 + $0x1d8] sm:$0xff]
    %v180 = vld [vmem:[#allocation6 + $0x1e0] sm:$0xff]
    %v181 = vld [vmem:[#allocation6 + $0x1e8] sm:$0xff]
    %v182 = vld [vmem:[#allocation6 + $0x1f0] sm:$0xff]
    %v183 = vld [vmem:[#allocation6 + $0x1f8] sm:$0xff]
    %184 = vmatpush.msra.mxu0 %v180
    %185 = vmatpush.msra.mxu0 %v176
    %186 = vmatpush.msra.mxu0 %v172
    %187 = vmatpush.msra.mxu0 %v168
    %188 = vmatpush.msra.mxu0 %v164
    %189 = vmatpush.msra.mxu0 %v160
    %190 = vmatpush.msra.mxu0 %v156
    %191 = vmatpush.msra.mxu0 %v152
    %192 = vmatpush.msra.mxu0 %v148
    %193 = vmatpush.msra.mxu0 %v144
    %194 = vmatpush.msra.mxu0 %v140
    %195 = vmatpush.msra.mxu0 %v136
    %196 = vmatpush.msra.mxu0 %v132
    %197 = vmatpush.msra.mxu0 %v128
    %198 = vmatpush.msra.mxu0 %v124
    %199 = vmatpush.msra.mxu0 %v120
    %200 = vmatmul.f32.gmra.mxu0 %v112
    %v201 = vpop.f32.mrf.mxu0
    %v202 = vadd.f32 0.0, %v201
    %203 = vmatmul.f32.gmra.mxu0 %v113
    %v204 = vpop.f32.mrf.mxu0
    %v205 = vadd.f32 0.0, %v204
    %206 = vmatmul.f32.gmra.mxu0 %v114
    %v207 = vpop.f32.mrf.mxu0
    %v208 = vadd.f32 0.0, %v207
    %209 = vmatmul.f32.gmra.mxu0 %v115
    %v210 = vpop.f32.mrf.mxu0
    %v211 = vadd.f32 0.0, %v210
    %212 = vmatmul.f32.gmra.mxu0 %v116
    %v213 = vpop.f32.mrf.mxu0
    %v214 = vadd.f32 0.0, %v213
    %215 = vmatmul.f32.gmra.mxu0 %v117
    %v216 = vpop.f32.mrf.mxu0
    %v217 = vadd.f32 0.0, %v216
    %218 = vmatmul.f32.gmra.mxu0 %v118
    %v219 = vpop.f32.mrf.mxu0
    %v220 = vadd.f32 0.0, %v219
    %221 = vmatmul.f32.gmra.mxu0 %v119
    %v222 = vpop.f32.mrf.mxu0
    %v223 = vadd.f32 0.0, %v222
    %224 = vdwg.mxu0
    %225 = vmatpush.msra.mxu0 %v181
    %226 = vmatpush.msra.mxu0 %v177
    %227 = vmatpush.msra.mxu0 %v173
    %228 = vmatpush.msra.mxu0 %v169
    %229 = vmatpush.msra.mxu0 %v165
    %230 = vmatpush.msra.mxu0 %v161
    %231 = vmatpush.msra.mxu0 %v157
    %232 = vmatpush.msra.mxu0 %v153
    %233 = vmatpush.msra.mxu0 %v149
    %234 = vmatpush.msra.mxu0 %v145
    %235 = vmatpush.msra.mxu0 %v141
    %236 = vmatpush.msra.mxu0 %v137
    %237 = vmatpush.msra.mxu0 %v133
    %238 = vmatpush.msra.mxu0 %v129
    %239 = vmatpush.msra.mxu0 %v125
    %240 = vmatpush.msra.mxu0 %v121
    %241 = vmatmul.f32.gmra.mxu0 %v112
    %v242 = vpop.f32.mrf.mxu0
    %v243 = vadd.f32 0.0, %v242
    %244 = vmatmul.f32.gmra.mxu0 %v113
    %v245 = vpop.f32.mrf.mxu0
    %v246 = vadd.f32 0.0, %v245
    %247 = vmatmul.f32.gmra.mxu0 %v114
    %v248 = vpop.f32.mrf.mxu0
    %v249 = vadd.f32 0.0, %v248
    %250 = vmatmul.f32.gmra.mxu0 %v115
    %v251 = vpop.f32.mrf.mxu0
    %v252 = vadd.f32 0.0, %v251
    %253 = vmatmul.f32.gmra.mxu0 %v116
    %v254 = vpop.f32.mrf.mxu0
    %v255 = vadd.f32 0.0, %v254
    %256 = vmatmul.f32.gmra.mxu0 %v117
    %v257 = vpop.f32.mrf.mxu0
    %v258 = vadd.f32 0.0, %v257
    %259 = vmatmul.f32.gmra.mxu0 %v118
    %v260 = vpop.f32.mrf.mxu0
    %v261 = vadd.f32 0.0, %v260
    %262 = vmatmul.f32.gmra.mxu0 %v119
    %v263 = vpop.f32.mrf.mxu0
    %v264 = vadd.f32 0.0, %v263
    %265 = vdwg.mxu0
    %266 = vmatpush.msra.mxu0 %v182
    %267 = vmatpush.msra.mxu0 %v178
    %268 = vmatpush.msra.mxu0 %v174
    %269 = vmatpush.msra.mxu0 %v170
    %270 = vmatpush.msra.mxu0 %v166
    %271 = vmatpush.msra.mxu0 %v162
    %272 = vmatpush.msra.mxu0 %v158
    %273 = vmatpush.msra.mxu0 %v154
    %274 = vmatpush.msra.mxu0 %v150
    %275 = vmatpush.msra.mxu0 %v146
    %276 = vmatpush.msra.mxu0 %v142
    %277 = vmatpush.msra.mxu0 %v138
    %278 = vmatpush.msra.mxu0 %v134
    %279 = vmatpush.msra.mxu0 %v130
    %280 = vmatpush.msra.mxu0 %v126
    %281 = vmatpush.msra.mxu0 %v122
    %282 = vmatmul.f32.gmra.mxu0 %v112
    %v283 = vpop.f32.mrf.mxu0
    %v284 = vadd.f32 0.0, %v283
    %285 = vmatmul.f32.gmra.mxu0 %v113
    %v286 = vpop.f32.mrf.mxu0
    %v287 = vadd.f32 0.0, %v286
    %288 = vmatmul.f32.gmra.mxu0 %v114
    %v289 = vpop.f32.mrf.mxu0
    %v290 = vadd.f32 0.0, %v289
    %291 = vmatmul.f32.gmra.mxu0 %v115
    %v292 = vpop.f32.mrf.mxu0
    %v293 = vadd.f32 0.0, %v292
    %294 = vmatmul.f32.gmra.mxu0 %v116
    %v295 = vpop.f32.mrf.mxu0
    %v296 = vadd.f32 0.0, %v295
    %297 = vmatmul.f32.gmra.mxu0 %v117
    %v298 = vpop.f32.mrf.mxu0
    %v299 = vadd.f32 0.0, %v298
    %300 = vmatmul.f32.gmra.mxu0 %v118
    %v301 = vpop.f32.mrf.mxu0
    %v302 = vadd.f32 0.0, %v301
    %303 = vmatmul.f32.gmra.mxu0 %v119
    %v304 = vpop.f32.mrf.mxu0
    %v305 = vadd.f32 0.0, %v304
    %306 = vdwg.mxu0
    %307 = vmatpush.msra.mxu0 %v183
    %308 = vmatpush.msra.mxu0 %v179
    %309 = vmatpush.msra.mxu0 %v175
    %310 = vmatpush.msra.mxu0 %v171
    %311 = vmatpush.msra.mxu0 %v167
    %312 = vmatpush.msra.mxu0 %v163
    %313 = vmatpush.msra.mxu0 %v159
    %314 = vmatpush.msra.mxu0 %v155
    %315 = vmatpush.msra.mxu0 %v151
    %316 = vmatpush.msra.mxu0 %v147
    %317 = vmatpush.msra.mxu0 %v143
    %318 = vmatpush.msra.mxu0 %v139
    %319 = vmatpush.msra.mxu0 %v135
    %320 = vmatpush.msra.mxu0 %v131
    %321 = vmatpush.msra.mxu0 %v127
    %322 = vmatpush.msra.mxu0 %v123
    %323 = vmatmul.f32.gmra.mxu0 %v112
    %v324 = vpop.f32.mrf.mxu0
    %v325 = vadd.f32 0.0, %v324
    %326 = vmatmul.f32.gmra.mxu0 %v113
    %v327 = vpop.f32.mrf.mxu0
    %v328 = vadd.f32 0.0, %v327
    %329 = vmatmul.f32.gmra.mxu0 %v114
    %v330 = vpop.f32.mrf.mxu0
    %v331 = vadd.f32 0.0, %v330
    %332 = vmatmul.f32.gmra.mxu0 %v115
    %v333 = vpop.f32.mrf.mxu0
    %v334 = vadd.f32 0.0, %v333
    %335 = vmatmul.f32.gmra.mxu0 %v116
    %v336 = vpop.f32.mrf.mxu0
    %v337 = vadd.f32 0.0, %v336
    %338 = vmatmul.f32.gmra.mxu0 %v117
    %v339 = vpop.f32.mrf.mxu0
    %v340 = vadd.f32 0.0, %v339
    %341 = vmatmul.f32.gmra.mxu0 %v118
    %v342 = vpop.f32.mrf.mxu0
    %v343 = vadd.f32 0.0, %v342
    %344 = vmatmul.f32.gmra.mxu0 %v119
    %v345 = vpop.f32.mrf.mxu0
    %v346 = vadd.f32 0.0, %v345
    %347 = vdwg.mxu0
    %v348 = vadd.f32 %v80, %v202
    %v349 = vadd.f32 %v81, %v243
    %v350 = vadd.f32 %v82, %v284
    %v351 = vadd.f32 %v83, %v325
    %v352 = vadd.f32 %v84, %v205
    %v353 = vadd.f32 %v85, %v246
    %v354 = vadd.f32 %v86, %v287
    %v355 = vadd.f32 %v87, %v328
    %v356 = vadd.f32 %v88, %v208
    %v357 = vadd.f32 %v89, %v249
    %v358 = vadd.f32 %v90, %v290
    %v359 = vadd.f32 %v91, %v331
    %v360 = vadd.f32 %v92, %v211
    %v361 = vadd.f32 %v93, %v252
    %v362 = vadd.f32 %v94, %v293
    %v363 = vadd.f32 %v95, %v334
    %v364 = vadd.f32 %v96, %v214
    %v365 = vadd.f32 %v97, %v255
    %v366 = vadd.f32 %v98, %v296
    %v367 = vadd.f32 %v99, %v337
    %v368 = vadd.f32 %v100, %v217
    %v369 = vadd.f32 %v101, %v258
    %v370 = vadd.f32 %v102, %v299
    %v371 = vadd.f32 %v103, %v340
    %v372 = vadd.f32 %v104, %v220
    %v373 = vadd.f32 %v105, %v261
    %v374 = vadd.f32 %v106, %v302
    %v375 = vadd.f32 %v107, %v343
    %v376 = vadd.f32 %v108, %v223
    %v377 = vadd.f32 %v109, %v264
    %v378 = vadd.f32 %v110, %v305
    %v379 = vadd.f32 %v111, %v346
    %380 = vst [vmem:[#allocation2] sm:$0xff] %v348
    %381 = vst [vmem:[#allocation2 + $0x8] sm:$0xff] %v349
    %382 = vst [vmem:[#allocation2 + $0x10] sm:$0xff] %v350
    %383 = vst [vmem:[#allocation2 + $0x18] sm:$0xff] %v351
    %384 = vst [vmem:[#allocation2 + $0x20] sm:$0xff] %v352
    %385 = vst [vmem:[#allocation2 + $0x28] sm:$0xff] %v353
    %386 = vst [vmem:[#allocation2 + $0x30] sm:$0xff] %v354
    %387 = vst [vmem:[#allocation2 + $0x38] sm:$0xff] %v355
    %388 = vst [vmem:[#allocation2 + $0x40] sm:$0xff] %v356
    %389 = vst [vmem:[#allocation2 + $0x48] sm:$0xff] %v357
    %390 = vst [vmem:[#allocation2 + $0x50] sm:$0xff] %v358
    %391 = vst [vmem:[#allocation2 + $0x58] sm:$0xff] %v359
    %392 = vst [vmem:[#allocation2 + $0x60] sm:$0xff] %v360
    %393 = vst [vmem:[#allocation2 + $0x68] sm:$0xff] %v361
    %394 = vst [vmem:[#allocation2 + $0x70] sm:$0xff] %v362
    %395 = vst [vmem:[#allocation2 + $0x78] sm:$0xff] %v363
    %396 = vst [vmem:[#allocation2 + $0x80] sm:$0xff] %v364
    %397 = vst [vmem:[#allocation2 + $0x88] sm:$0xff] %v365
    %398 = vst [vmem:[#allocation2 + $0x90] sm:$0xff] %v366
    %399 = vst [vmem:[#allocation2 + $0x98] sm:$0xff] %v367
    %400 = vst [vmem:[#allocation2 + $0xa0] sm:$0xff] %v368
    %401 = vst [vmem:[#allocation2 + $0xa8] sm:$0xff] %v369
    %402 = vst [vmem:[#allocation2 + $0xb0] sm:$0xff] %v370
    %403 = vst [vmem:[#allocation2 + $0xb8] sm:$0xff] %v371
    %404 = vst [vmem:[#allocation2 + $0xc0] sm:$0xff] %v372
    %405 = vst [vmem:[#allocation2 + $0xc8] sm:$0xff] %v373
    %406 = vst [vmem:[#allocation2 + $0xd0] sm:$0xff] %v374
    %407 = vst [vmem:[#allocation2 + $0xd8] sm:$0xff] %v375
    %408 = vst [vmem:[#allocation2 + $0xe0] sm:$0xff] %v376
    %409 = vst [vmem:[#allocation2 + $0xe8] sm:$0xff] %v377
    %410 = vst [vmem:[#allocation2 + $0xf0] sm:$0xff] %v378
    %411 = vst [vmem:[#allocation2 + $0xf8] sm:$0xff] %v379
    // Predicated region
    $region22: #{tpu_custom_call.1} parent=1 // pred_check
      %p412 = pneg %p44
    $region23: #{tpu_custom_call.1} parent=1 // pred_check_branch
      %414 = sbr.rel (%p412) target = $region25
    $region24: #{tpu_custom_call.1} parent=1 // pred_region
      %v415 = vld [vmem:[#allocation2] sm:$0xff]
      %v416 = vld [vmem:[#allocation2 + $0x8] sm:$0xff]
      %v417 = vld [vmem:[#allocation2 + $0x10] sm:$0xff]
      %v418 = vld [vmem:[#allocation2 + $0x18] sm:$0xff]
      %v419 = vld [vmem:[#allocation2 + $0x20] sm:$0xff]
      %v420 = vld [vmem:[#allocation2 + $0x28] sm:$0xff]
      %v421 = vld [vmem:[#allocation2 + $0x30] sm:$0xff]
      %v422 = vld [vmem:[#allocation2 + $0x38] sm:$0xff]
      %v423 = vld [vmem:[#allocation2 + $0x40] sm:$0xff]
      %v424 = vld [vmem:[#allocation2 + $0x48] sm:$0xff]
      %v425 = vld [vmem:[#allocation2 + $0x50] sm:$0xff]
      %v426 = vld [vmem:[#allocation2 + $0x58] sm:$0xff]
      %v427 = vld [vmem:[#allocation2 + $0x60] sm:$0xff]
      %v428 = vld [vmem:[#allocation2 + $0x68] sm:$0xff]
      %v429 = vld [vmem:[#allocation2 + $0x70] sm:$0xff]
      %v430 = vld [vmem:[#allocation2 + $0x78] sm:$0xff]
      %v431 = vld [vmem:[#allocation2 + $0x80] sm:$0xff]
      %v432 = vld [vmem:[#allocation2 + $0x88] sm:$0xff]
      %v433 = vld [vmem:[#allocation2 + $0x90] sm:$0xff]
      %v434 = vld [vmem:[#allocation2 + $0x98] sm:$0xff]
      %v435 = vld [vmem:[#allocation2 + $0xa0] sm:$0xff]
      %v436 = vld [vmem:[#allocation2 + $0xa8] sm:$0xff]
      %v437 = vld [vmem:[#allocation2 + $0xb0] sm:$0xff]
      %v438 = vld [vmem:[#allocation2 + $0xb8] sm:$0xff]
      %v439 = vld [vmem:[#allocation2 + $0xc0] sm:$0xff]
      %v440 = vld [vmem:[#allocation2 + $0xc8] sm:$0xff]
      %v441 = vld [vmem:[#allocation2 + $0xd0] sm:$0xff]
      %v442 = vld [vmem:[#allocation2 + $0xd8] sm:$0xff]
      %v443 = vld [vmem:[#allocation2 + $0xe0] sm:$0xff]
      %v444 = vld [vmem:[#allocation2 + $0xe8] sm:$0xff]
      %v445 = vld [vmem:[#allocation2 + $0xf0] sm:$0xff]
      %v446 = vld [vmem:[#allocation2 + $0xf8] sm:$0xff]
      %447 = vst [vmem:[#allocation8] sm:$0xff] %v415
      %448 = vst [vmem:[#allocation8 + $0x8] sm:$0xff] %v416
      %449 = vst [vmem:[#allocation8 + $0x10] sm:$0xff] %v417
      %450 = vst [vmem:[#allocation8 + $0x18] sm:$0xff] %v418
      %451 = vst [vmem:[#allocation8 + $0x20] sm:$0xff] %v419
      %452 = vst [vmem:[#allocation8 + $0x28] sm:$0xff] %v420
      %453 = vst [vmem:[#allocation8 + $0x30] sm:$0xff] %v421
      %454 = vst [vmem:[#allocation8 + $0x38] sm:$0xff] %v422
      %455 = vst [vmem:[#allocation8 + $0x40] sm:$0xff] %v423
      %456 = vst [vmem:[#allocation8 + $0x48] sm:$0xff] %v424
      %457 = vst [vmem:[#allocation8 + $0x50] sm:$0xff] %v425
      %458 = vst [vmem:[#allocation8 + $0x58] sm:$0xff] %v426
      %459 = vst [vmem:[#allocation8 + $0x60] sm:$0xff] %v427
      %460 = vst [vmem:[#allocation8 + $0x68] sm:$0xff] %v428
      %461 = vst [vmem:[#allocation8 + $0x70] sm:$0xff] %v429
      %462 = vst [vmem:[#allocation8 + $0x78] sm:$0xff] %v430
      %463 = vst [vmem:[#allocation8 + $0x80] sm:$0xff] %v431
      %464 = vst [vmem:[#allocation8 + $0x88] sm:$0xff] %v432
      %465 = vst [vmem:[#allocation8 + $0x90] sm:$0xff] %v433
      %466 = vst [vmem:[#allocation8 + $0x98] sm:$0xff] %v434
      %467 = vst [vmem:[#allocation8 + $0xa0] sm:$0xff] %v435
      %468 = vst [vmem:[#allocation8 + $0xa8] sm:$0xff] %v436
      %469 = vst [vmem:[#allocation8 + $0xb0] sm:$0xff] %v437
      %470 = vst [vmem:[#allocation8 + $0xb8] sm:$0xff] %v438
      %471 = vst [vmem:[#allocation8 + $0xc0] sm:$0xff] %v439
      %472 = vst [vmem:[#allocation8 + $0xc8] sm:$0xff] %v440
      %473 = vst [vmem:[#allocation8 + $0xd0] sm:$0xff] %v441
      %474 = vst [vmem:[#allocation8 + $0xd8] sm:$0xff] %v442
      %475 = vst [vmem:[#allocation8 + $0xe0] sm:$0xff] %v443
      %476 = vst [vmem:[#allocation8 + $0xe8] sm:$0xff] %v444
      %477 = vst [vmem:[#allocation8 + $0xf0] sm:$0xff] %v445
      %478 = vst [vmem:[#allocation8 + $0xf8] sm:$0xff] %v446
    $region25: #{tpu_custom_call.1} parent=1 // pred_fallthru
      _
    // Predicated region
    $region26: #{tpu_custom_call.1} parent=1 // pred_check
      _
    $region27: #{tpu_custom_call.1} parent=1 // pred_check_branch
      %480 = sbr.rel (0) target = $region29
    $region28: #{tpu_custom_call.1} parent=1 // pred_region
      %482 = vsyncadd [#allocation5], 0
      %s483 = sshll.u32 [#allocation8], 4
      %s484 = int_to_ptr.vmem [resolvable:$true] %s483
      %s485 = sshll.u32 %s2, 4
      %s486 = int_to_ptr.hbm [resolvable:$true] %s485
      %491 = dma.vmem_to_hbm [thread:$0]  %s484, 4096, %s486, [#allocation5], 512, 512, 32
    $region29: #{tpu_custom_call.1} parent=1 // pred_fallthru
      _
    // Predicated region
    $region30: #{tpu_custom_call.1} parent=1 // pred_check
      _
    $region31: #{tpu_custom_call.1} parent=1 // pred_check_branch
      %493 = sbr.rel (0) target = $region33
    $region32: #{tpu_custom_call.1} parent=1 // pred_region
      %495 = dma.done [#allocation5], 4096
    $region33: #{tpu_custom_call.1} parent=1 // pred_fallthru
      _
    %496 = vsyncpa [#allocation4], 1
    %497 = vsyncpa [#allocation7], 1
    %498 = vsyncpa [#allocation5], 1

</llo_original>
